<compile_context>
chip_gen: v7x
topology: tpu7x:2x2x1
jax: 0.10.0
libtpu: 0.0.40
codegen_flags: <defaults>
</compile_context>

<pallas_src>
from functools import partial

import jax
import jax.numpy as jnp
import numpy as np
from jax import lax
from jax.experimental import pallas as pl
from jax.experimental.pallas import tpu as pltpu  # noqa: F401  (TPU backend)

split_factor = 2


def _round_up(x, m):
    return (x + m - 1) // m * m


def _gemm_bias_kernel(col_ref, w_ref, b_ref, o_ref):
    """Whole problem in one shot: out = W @ col + b  (single MXU matmul).

    col_ref: (K_pad, L_pad)       K_pad = pad8(k*k*C_in), L_pad = pad128(N*H_out*W_out)
    w_ref:   (C_out_pad, K_pad)
    b_ref:   (C_out_pad, 1)
    o_ref:   (C_out_pad, L_pad)   lane-dense store (L_pad % 128 == 0)
    """
    acc = jnp.dot(w_ref[...], col_ref[...], preferred_element_type=jnp.float32)
    o_ref[...] = (acc + b_ref[...]).astype(o_ref.dtype)


@partial(jax.jit, static_argnames=("k",))
def conv_first_half(x_nchw, weight_oihw, bias, k):
    """Pallas equivalent of kernel_generated.forward (NCHW in, NCHW out)."""
    N, C_in, H, W = x_nchw.shape
    C_out = weight_oihw.shape[0]
    H_half = H // split_factor          # only the first split is convolved
    H_out = H_half - k + 1
    W_out = W - k + 1
    K = C_in * k * k
    M = H_out * W_out
    L = N * M                           # batch folded into the lane axis

    K_pad = _round_up(K, 8)             # sublane-aligned contraction dim
    L_pad = _round_up(L, 128)           # lane-dense output dim
    C_out_pad = _round_up(C_out, 8)

    # ---- Glue: im2col layout plumbing (zero FLOPs, fused under this jit) ----
    xs = x_nchw[:, :, :H_half, :]                              # (N, C_in, H_half, W)
    taps = [
        xs[:, :, kh:kh + H_out, kw:kw + W_out]                 # (N, C_in, H_out, W_out)
        for kh in range(k)
        for kw in range(k)
    ]
    # Contraction axis ordered (c_in, kh, kw) to match OIHW weight flattening.
    col = jnp.stack(taps, axis=2).reshape(N, K, M)             # (N, K, M)
    col = col.transpose(1, 0, 2).reshape(K, L)                 # (K, N*M), col idx = n*M + m
    col = jnp.pad(col, ((0, K_pad - K), (0, L_pad - L)))       # zero-pad to aligned tile

    w2d = weight_oihw.reshape(C_out, K)
    w2d = jnp.pad(w2d, ((0, C_out_pad - C_out), (0, K_pad - K)))
    b2d = jnp.pad(bias.reshape(C_out, 1), ((0, C_out_pad - C_out), (0, 0)))

    out_p = pl.pallas_call(
        _gemm_bias_kernel,
        out_shape=jax.ShapeDtypeStruct((C_out_pad, L_pad), x_nchw.dtype),
        in_specs=[
            pl.BlockSpec((K_pad, L_pad), lambda: (0, 0)),
            pl.BlockSpec((C_out_pad, K_pad), lambda: (0, 0)),
            pl.BlockSpec((C_out_pad, 1), lambda: (0, 0)),
        ],
        out_specs=pl.BlockSpec((C_out_pad, L_pad), lambda: (0, 0)),
    )(col, w2d, b2d)

    # Strip padding and un-permute to NCHW (tiny ~5 KiB transpose).
    out = out_p[:C_out, :L].reshape(C_out, N, H_out, W_out)
    return jnp.transpose(out, (1, 0, 2, 3))


if __name__ == "__main__":
    # Small shapes consistent with the module: Conv2d(C_in, C_out, (k, k)).
    N, C_in, C_out, H, W, k = 2, 4, 8, 16, 16, 3

    key = jax.random.PRNGKey(0)
    kw_key, kb_key, kx_key = jax.random.split(key, 3)
    weight = jax.random.normal(kw_key, (C_out, C_in, k, k), jnp.float32) * 0.1
    bias = jax.random.normal(kb_key, (C_out,), jnp.float32) * 0.1
    x = jax.random.normal(kx_key, (N, C_in, H, W), jnp.float32)

    out = jax.block_until_ready(conv_first_half(x, weight, bias, k))

    # Reference: plain-JAX valid conv on the first H//2 rows (same semantics as
    # the PyTorch module, whose single conv only sees the first split).
    H_half = H // split_factor
    ref = lax.conv_general_dilated(
        x[:, :, :H_half, :],
        weight,
        window_strides=(1, 1),
        padding="VALID",
        dimension_numbers=("NCHW", "OIHW", "NCHW"),
    ) + bias.reshape(1, C_out, 1, 1)

    assert out.shape == (N, C_out, H_half - k + 1, W - k + 1), out.shape
    np.testing.assert_allclose(np.asarray(out), np.asarray(ref), rtol=1e-5, atol=1e-5)

    print("KERNEL_OK")
</pallas_src>

<mosaic_0001>
module attributes {stable_mosaic.version = 11 : i64} {
  func.func @_gemm_bias_kernel(%arg0: memref<40x256xf32, #tpu.memory_space<vmem>>, %arg1: memref<8x40xf32, #tpu.memory_space<vmem>>, %arg2: memref<8x1xf32, #tpu.memory_space<vmem>>, %arg3: memref<8x256xf32, #tpu.memory_space<vmem>>) attributes {dimension_semantics = [], scalar_prefetch = 0 : i64, scratch_operands = 0 : i64, tpu.core_type = #tpu.core_type<tc>} {
    %c0 = arith.constant 0 : index
    %c0_0 = arith.constant 0 : index
    %0 = vector.load %arg1[%c0, %c0_0] : memref<8x40xf32, #tpu.memory_space<vmem>>, vector<8x40xf32>
    %c0_1 = arith.constant 0 : index
    %c0_2 = arith.constant 0 : index
    %1 = vector.load %arg0[%c0_1, %c0_2] : memref<40x256xf32, #tpu.memory_space<vmem>>, vector<40x256xf32>
    %cst = arith.constant dense<0.000000e+00> : vector<8x256xf32>
    %2 = tpu.matmul %0, %1, %cst {dimension_numbers = #tpu.dot_dimension_numbers<[1], [0], [0], [1], [0, 0, 1, 1], [], []>} : vector<8x40xf32>, vector<40x256xf32>, vector<8x256xf32> -> vector<8x256xf32>
    %c0_3 = arith.constant 0 : index
    %c0_4 = arith.constant 0 : index
    %3 = vector.load %arg2[%c0_3, %c0_4] : memref<8x1xf32, #tpu.memory_space<vmem>>, vector<8x1xf32>
    %4 = vector.broadcast %3 : vector<8x1xf32> to vector<8x256xf32>
    %5 = arith.addf %2, %4 : vector<8x256xf32>
    %c0_5 = arith.constant 0 : index
    %c0_6 = arith.constant 0 : index
    %6 = vector.load %arg3[%c0_5, %c0_6] : memref<8x256xf32, #tpu.memory_space<vmem>>, vector<8x256xf32>
    tpu.vector_store %arg3[%c0_5, %c0_6], %5 {strides = array<i32>} : memref<8x256xf32, #tpu.memory_space<vmem>>, vector<8x256xf32>,
    return
  }
}

</mosaic_0001>

<llo_original>
// kernel: conv_first_half.1
$region0: #{conv_first_half.1}
  #allocation0 [shape = 'u32[]', space=smem, size = 0x4, offset = 0x4, fixed_abs, tag = 'smem constant byte address 0x4 - core index']
  #allocation1 [shape = 'u32[144,128]{1,0:T(1,128)}', space=vmem, size = 0x12000, scoped, tag = 'internal scratch']
  %s0 = inlined_call_operand.vmem [shape: f32[40,256], index: 0, kind: input, shape index: {}]
  %s1 = inlined_call_operand.vmem [shape: f32[8,40], index: 1, kind: input, shape index: {}]
  %s2 = inlined_call_operand.vmem [shape: f32[8,1], index: 2, kind: input, shape index: {}]
  %s3 = inlined_call_operand.vmem [shape: f32[8,256], index: 3, kind: output, shape index: {}]
  %s4 = sld [smem:[#allocation0]]
  $region22: #{conv_first_half.1} parent=0
    _
  %s6 = ssub.s32 1, %s4
  %s7 = scalar_select 0, %s6, %s4
  // Predicated region
  $region2: #{conv_first_half.1} parent=0 // pred_check
    _
  $region3: #{conv_first_half.1} parent=0 // pred_check_branch
    %9 = sbr.rel (0) target = $region5
  $region4: #{conv_first_half.1} parent=0 // pred_region
    _
  $region5: #{conv_first_half.1} parent=0 // pred_fallthru
    _
  // Predicated region
  $region6: #{conv_first_half.1} parent=0 // pred_check
    _
  $region7: #{conv_first_half.1} parent=0 // pred_check_branch
    %11 = sbr.rel (0) target = $region9
  $region8: #{conv_first_half.1} parent=0 // pred_region
    _
  $region9: #{conv_first_half.1} parent=0 // pred_fallthru
    _
  // Predicated region
  $region10: #{conv_first_half.1} parent=0 // pred_check
    _
  $region11: #{conv_first_half.1} parent=0 // pred_check_branch
    %13 = sbr.rel (0) target = $region13
  $region12: #{conv_first_half.1} parent=0 // pred_region
    _
  $region13: #{conv_first_half.1} parent=0 // pred_fallthru
    _
  %v14 = vld [vmem:[%s1] sm:$0xff]
  %v15 = vld [vmem:[%s0] sm:$0xff]
  %v16 = vld [vmem:[%s0 + $0x8] sm:$0xff]
  %v17 = vld [vmem:[%s0 + $0x10] sm:$0xff]
  %v18 = vld [vmem:[%s0 + $0x18] sm:$0xff]
  %v19 = vld [vmem:[%s0 + $0x20] sm:$0xff]
  %v20 = vld [vmem:[%s0 + $0x28] sm:$0xff]
  %v21 = vld [vmem:[%s0 + $0x30] sm:$0xff]
  %v22 = vld [vmem:[%s0 + $0x38] sm:$0xff]
  %v23 = vld [vmem:[%s0 + $0x40] sm:$0xff]
  %v24 = vld [vmem:[%s0 + $0x48] sm:$0xff]
  %v25 = vld [vmem:[%s2] sm:$0xff]
  %27 = vset.pattern.permute.xlu0 0
  %28 = vperm.xlu0 %27, %v25
  %v29 = vpop.permute.xlu0 %28
  %vm31 = vcmask 326656
  %v33 = vsel %vm31, %v14, 0
  %35 = vmatprep.subr.mxu0 %v16
  %36 = vmatpush1.msra.mxu0 %v15
  %37 = vmatprep.subr.mxu0 %v18
  %38 = vmatpush1.msra.mxu0 %v17
  %39 = vmatprep.subr.mxu0 %v20
  %40 = vmatpush1.msra.mxu0 %v19
  %41 = vmatprep.subr.mxu0 %v22
  %42 = vmatpush1.msra.mxu0 %v21
  %43 = vmatprep.subr.mxu0 %v24
  %44 = vmatpush1.msra.mxu0 %v23
  %45 = vmatprep.subr.mxu0 0.0
  %46 = vmatpush1.msra.mxu0 0.0
  %47 = vmatprep.subr.mxu0 0.0
  %48 = vmatpush1.msra.mxu0 0.0
  %49 = vmatprep.subr.mxu0 0.0
  %50 = vmatpush1.msra.mxu0 0.0
  %51 = vmatprep.subr.mxu0 0.0
  %52 = vmatpush1.msra.mxu0 0.0
  %53 = vmatprep.subr.mxu0 0.0
  %54 = vmatpush1.msra.mxu0 0.0
  %55 = vmatprep.subr.mxu0 0.0
  %56 = vmatpush1.msra.mxu0 0.0
  %57 = vmatprep.subr.mxu0 0.0
  %58 = vmatpush1.msra.mxu0 0.0
  %59 = vmatprep.subr.mxu0 0.0
  %60 = vmatpush1.msra.mxu0 0.0
  %61 = vmatprep.subr.mxu0 0.0
  %62 = vmatpush1.msra.mxu0 0.0
  %63 = vmatprep.subr.mxu0 0.0
  %64 = vmatpush1.msra.mxu0 0.0
  %65 = vmatprep.subr.mxu0 0.0
  %66 = vmatpush1.msra.mxu0 0.0
  %67 = vmatprep.subr.mxu0 0.0
  %68 = vmatpush1.msra.mxu0 0.0
  %69 = vmatprep.subr.mxu0 0.0
  %70 = vmatpush1.msra.mxu0 0.0
  %71 = vmatprep.subr.mxu0 0.0
  %72 = vmatpush1.msra.mxu0 0.0
  %73 = vmatprep.subr.mxu0 0.0
  %74 = vmatpush1.msra.mxu0 0.0
  %75 = vmatprep.subr.mxu0 0.0
  %76 = vmatpush1.msra.mxu0 0.0
  %77 = vmatprep.subr.mxu0 0.0
  %78 = vmatpush1.msra.mxu0 0.0
  %79 = vmatprep.subr.mxu0 0.0
  %80 = vmatpush1.msra.mxu0 0.0
  %81 = vmatprep.subr.mxu0 0.0
  %82 = vmatpush1.msra.mxu0 0.0
  %83 = vmatprep.subr.mxu0 0.0
  %84 = vmatpush1.msra.mxu0 0.0
  %85 = vmatprep.subr.mxu0 0.0
  %86 = vmatpush1.msra.mxu0 0.0
  %87 = vmatprep.subr.mxu0 0.0
  %88 = vmatpush1.msra.mxu0 0.0
  %89 = vmatprep.subr.mxu0 0.0
  %90 = vmatpush1.msra.mxu0 0.0
  %91 = vmatprep.subr.mxu0 0.0
  %92 = vmatpush1.msra.mxu0 0.0
  %93 = vmatprep.subr.mxu0 0.0
  %94 = vmatpush1.msra.mxu0 0.0
  %95 = vmatprep.subr.mxu0 0.0
  %96 = vmatpush1.msra.mxu0 0.0
  %97 = vmatprep.subr.mxu0 0.0
  %98 = vmatpush1.msra.mxu0 0.0
  %99 = vmatprep.mubr.f32.mxu0 0.0
  %100 = vmatmul.mubr.f32.gmra.mrb[0].mxu0 %v33
  %v101 = vpop.f32.mrb[0].mxu0
  %v102 = vadd.f32 %v29, %v101
  %v103 = vpop.f32.mrb[0].mxu0
  %v104 = vadd.f32 %v29, %v103
  %105 = vdwg.mxu0
  %106 = vst [vmem:[%s3] sm:$0xff] %v102
  %107 = vst [vmem:[%s3 + $0x8] sm:$0xff] %v104
  // Predicated region
  $region14: #{conv_first_half.1} parent=0 // pred_check
    _
  $region15: #{conv_first_half.1} parent=0 // pred_check_branch
    %109 = sbr.rel (0) target = $region17
  $region16: #{conv_first_half.1} parent=0 // pred_region
    _
  $region17: #{conv_first_half.1} parent=0 // pred_fallthru
    _
  // Predicated region
  $region18: #{conv_first_half.1} parent=0 // pred_check
    _
  $region19: #{conv_first_half.1} parent=0 // pred_check_branch
    %111 = sbr.rel (0) target = $region21
  $region20: #{conv_first_half.1} parent=0 // pred_region
    _
  $region21: #{conv_first_half.1} parent=0 // pred_fallthru
    _

</llo_original>
